<compile_context>
chip_gen: v5e
topology: v5e:2x2
jax: 0.10.0
libtpu: 0.0.40
codegen_flags: <defaults>
</compile_context>

<pallas_src>
import functools

import jax
import jax.numpy as jnp
import numpy as np
from jax.experimental import pallas as pl
from jax.experimental.pallas import tpu as pltpu


# ---------------------------------------------------------------------------
# Config (deterministic, in-script — mirrors the PyTorch module's __init__)
# ---------------------------------------------------------------------------
NUM_CLASSES = 5
ALPHA = (0.8, 1.2, 0.8, 1.0, 0.8)
GAMMA = 2.0
SMOOTHING = 0.1
FOCAL_WEIGHT = 1.0
SMOOTHING_WEIGHT = 0.5

TILE_N = 32768  # max batch columns (lanes) per grid step


def _round_up(x, m):
    return (x + m - 1) // m * m


def _num_parallel_splits():
    """One partial accumulator per TensorCore.

    Only v7x-class chips expose two TensorCores per chip; on single-TC chips
    (v5e/v6e) an extra parallel split only adds padding + a second epilogue.
    TODO(synk): verify plain "parallel" shards across the two v7x TCs; if not,
    switch that grid axis to pltpu.CORE_PARALLEL.
    """
    try:
        kind = jax.devices()[0].device_kind.lower()
    except Exception:
        return 1
    return 2 if "v7" in kind else 1


# ---------------------------------------------------------------------------
# Pallas kernel
# ---------------------------------------------------------------------------
def _mixed_loss_kernel(alpha_ref, pred_ref, tgt_ref, out_ref, acc_ref, *,
                       num_classes, batch_n, tile_n, tiles_per_split,
                       gamma, smoothing, focal_w, smooth_w):
    p = pl.program_id(0)          # TensorCore split (parallel axis)
    i = pl.program_id(1)          # batch tile within this split (reduction axis)

    pred = pred_ref[...]          # (C, tile_n) f32, class on sublanes, C == num_classes
    tgt = tgt_ref[...]            # (1, tile_n) int32
    alpha_col = alpha_ref[...]    # (C, 1) f32

    c = pred.shape[0]
    row = jax.lax.broadcasted_iota(jnp.int32, (c, tile_n), 0)
    one_hot = (row == tgt).astype(jnp.float32)                 # (C, tile_n)

    # Numerically stable softmax pieces; log_softmax itself is never built.
    row_max = jnp.max(pred, axis=0, keepdims=True)             # (1, tile_n)
    shifted = pred - row_max                                    # (C, tile_n)
    expv = jnp.exp(shifted)                                     # (C, tile_n) EUP
    denom = jnp.sum(expv, axis=0, keepdims=True)                # (1, tile_n) XLU
    logden = jnp.log(denom)                                     # (1, tile_n) EUP

    # Gathered quantities (sublane reductions ride the XLU slot).
    lp_t = jnp.sum(one_hot * shifted, axis=0, keepdims=True) - logden   # log p_t
    sum_lsm = (jnp.sum(shifted, axis=0, keepdims=True)
               - jnp.float32(num_classes) * logden)             # sum_c log_softmax

    # alpha[target] via weighted one-hot: one (C, tile) mul + one sublane reduce.
    at = jnp.sum(alpha_col * one_hot, axis=0, keepdims=True)    # (1, tile_n)

    # Focal modulation (gamma == 2 is an exact square on the VPU).
    pt = jnp.exp(lp_t)
    one_minus_pt = 1.0 - pt
    if gamma == 2.0:
        focal_pow = one_minus_pt * one_minus_pt
    elif float(gamma).is_integer() and gamma >= 0:
        focal_pow = one_minus_pt ** int(gamma)
    else:
        focal_pow = jnp.power(jnp.maximum(one_minus_pt, 0.0), gamma)

    # Fused combine (compile-time constants folded):
    #   focal_w*(-at*(1-pt)^g*lp_t) + smooth_w*(-(conf*lp_t + sv*(sum_lsm-lp_t)))
    # = -lp_t*(focal_w*at*(1-pt)^g + smooth_w*(conf - sv)) - smooth_w*sv*sum_lsm
    confidence = 1.0 - smoothing
    smooth_val = smoothing / (num_classes - 1)
    c_lp = smooth_w * (confidence - smooth_val)
    c_sum = smooth_w * smooth_val
    focal_term = at * focal_pow
    if focal_w != 1.0:
        focal_term = focal_w * focal_term
    contrib = -lp_t * (focal_term + c_lp) - c_sum * sum_lsm     # (1, tile_n)

    @pl.when(i == 0)
    def _():
        acc_ref[...] = jnp.zeros_like(acc_ref)

    # Only the tile that straddles (or lies beyond) batch_n pays for the
    # iota/compare/select padding mask; interior tiles accumulate directly.
    base = (p * tiles_per_split + i) * tile_n
    needs_mask = base + tile_n > batch_n

    @pl.when(jnp.logical_not(needs_mask))
    def _():
        acc_ref[...] += contrib

    @pl.when(needs_mask)
    def _():
        col = base + jax.lax.broadcasted_iota(jnp.int32, (1, tile_n), 1)
        acc_ref[...] += jnp.where(col < batch_n, contrib, 0.0)

    @pl.when(i == tiles_per_split - 1)
    def _():
        partial = jnp.sum(acc_ref[...]) * (1.0 / batch_n)
        r = jax.lax.broadcasted_iota(jnp.int32, out_ref.shape, 0)
        cc = jax.lax.broadcasted_iota(jnp.int32, out_ref.shape, 1)
        out_ref[...] = jnp.where((r == 0) & (cc == 0), partial, 0.0)


# ---------------------------------------------------------------------------
# Wrapper
# ---------------------------------------------------------------------------
def mixed_loss(pred, target, *, tile_n=TILE_N):
    n, c = pred.shape

    splits = _num_parallel_splits() if n >= 2 else 1

    # Adaptive tile: padding bounded by ~128*splits columns instead of up to
    # 2*TILE_N-1, while still allowing large tiles to amortize step overhead.
    tile = min(tile_n, _round_up(max(pl.cdiv(n, splits), 1), 128))
    n_tiles = pl.cdiv(n, tile)
    n_tiles = _round_up(n_tiles, splits)
    tiles_per_split = n_tiles // splits
    n_pad = n_tiles * tile

    # Class-on-sublane layout, exactly `c` rows (no pad-to-8 of the class dim).
    # TODO(synk): eliminate this extra HBM pass by having the producer emit
    # pred already in (C, N) layout.
    pred_t = jnp.zeros((c, n_pad), jnp.float32)
    pred_t = pred_t.at[:, :n].set(pred.astype(jnp.float32).T)
    tgt_t = jnp.zeros((1, n_pad), jnp.int32)
    tgt_t = tgt_t.at[0, :n].set(target.astype(jnp.int32))
    alpha_col = jnp.asarray(ALPHA, jnp.float32).reshape(c, 1)

    kernel = functools.partial(
        _mixed_loss_kernel,
        num_classes=c, batch_n=n, tile_n=tile, tiles_per_split=tiles_per_split,
        gamma=GAMMA, smoothing=SMOOTHING,
        focal_w=FOCAL_WEIGHT, smooth_w=SMOOTHING_WEIGHT)

    partials = pl.pallas_call(
        kernel,
        out_shape=jax.ShapeDtypeStruct((splits * 8, 128), jnp.float32),
        grid=(splits, tiles_per_split),
        in_specs=[
            pl.BlockSpec((c, 1), lambda p, i: (0, 0)),                      # alpha
            pl.BlockSpec((c, tile),
                         lambda p, i: (0, p * tiles_per_split + i)),        # pred
            pl.BlockSpec((1, tile),
                         lambda p, i: (0, p * tiles_per_split + i)),        # target
        ],
        out_specs=pl.BlockSpec((8, 128), lambda p, i: (p, 0)),
        scratch_shapes=[pltpu.VMEM((1, tile), jnp.float32)],
        compiler_params=pltpu.CompilerParams(
            dimension_semantics=("parallel", "arbitrary"),
            # Headroom for 32768-lane tiles; safely below physical VMEM on
            # v5e/v6e (128 MiB) and v7x (64 MiB).
            vmem_limit_bytes=48 * 1024 * 1024),
    )(alpha_col, pred_t, tgt_t)

    # Only elements [p*8, 0] are non-zero; summing adds the per-core partials.
    return jnp.sum(partials)


# ---------------------------------------------------------------------------
# Pure-JAX reference (mirrors the PyTorch forward)
# ---------------------------------------------------------------------------
def mixed_loss_ref(pred, target):
    pred = pred.astype(jnp.float32)
    alpha = jnp.asarray(ALPHA, jnp.float32)
    one_hot = jax.nn.one_hot(target, NUM_CLASSES, dtype=jnp.float32)

    sm = jax.nn.softmax(pred, axis=1)
    pt = jnp.sum(one_hot * sm, axis=1)
    at = alpha[target]
    focal = jnp.mean(-at * (1.0 - pt) ** GAMMA * jnp.log(pt))

    logsm = jax.nn.log_softmax(pred, axis=-1)
    confidence = 1.0 - SMOOTHING
    smooth_val = SMOOTHING / (NUM_CLASSES - 1)
    true_dist = jnp.full_like(pred, smooth_val)
    true_dist = true_dist * (1.0 - one_hot) + confidence * one_hot
    ls = jnp.mean(jnp.sum(-true_dist * logsm, axis=-1))

    return FOCAL_WEIGHT * focal + SMOOTHING_WEIGHT * ls


if __name__ == "__main__":
    key = jax.random.PRNGKey(0)
    k1, k2 = jax.random.split(key)
    batch = 8
    pred = jax.random.normal(k1, (batch, NUM_CLASSES), dtype=jnp.float32)
    target = jax.random.randint(k2, (batch,), 0, NUM_CLASSES, dtype=jnp.int32)

    out = mixed_loss(pred, target)
    out = jax.block_until_ready(out)

    ref = jax.block_until_ready(mixed_loss_ref(pred, target))
    np.testing.assert_allclose(np.asarray(out), np.asarray(ref),
                               rtol=1e-5, atol=1e-5)
    print("KERNEL_OK")
</pallas_src>

<mosaic_0001>
module attributes {stable_mosaic.version = 11 : i64} {
  func.func @_mixed_loss_kernel(%arg0: i32, %arg1: i32, %arg2: memref<5x1xf32, #tpu.memory_space<vmem>>, %arg3: memref<5x128xf32, #tpu.memory_space<vmem>>, %arg4: memref<1x128xi32, #tpu.memory_space<vmem>>, %arg5: memref<8x128xf32, #tpu.memory_space<vmem>>, %arg6: memref<1x128xf32, #tpu.memory_space<vmem>>) attributes {dimension_semantics = [#tpu.dimension_semantics<parallel>, #tpu.dimension_semantics<arbitrary>], iteration_bounds = array<i64: 1, 1>, scalar_prefetch = 0 : i64, scratch_operands = 1 : i64, tpu.core_type = #tpu.core_type<tc>, window_params = [{pipeline_mode = #tpu.pipeline_mode<synchronous>, transform_indices = @transform_0, window_bounds = array<i64: 5, 1>}, {transform_indices = @transform_1, window_bounds = array<i64: 5, 128>}, {transform_indices = @transform_2, window_bounds = array<i64: 1, 128>}, {transform_indices = @transform_3, window_bounds = array<i64: 8, 128>}]} {
    %c0 = arith.constant 0 : index
    %c0_0 = arith.constant 0 : index
    %0 = vector.load %arg3[%c0, %c0_0] : memref<5x128xf32, #tpu.memory_space<vmem>>, vector<5x128xf32>
    %c0_1 = arith.constant 0 : index
    %c0_2 = arith.constant 0 : index
    %1 = vector.load %arg4[%c0_1, %c0_2] : memref<1x128xi32, #tpu.memory_space<vmem>>, vector<1x128xi32>
    %c0_3 = arith.constant 0 : index
    %c0_4 = arith.constant 0 : index
    %2 = vector.load %arg2[%c0_3, %c0_4] : memref<5x1xf32, #tpu.memory_space<vmem>>, vector<5x1xf32>
    %3 = tpu.iota {dimensions = array<i32: 0>} : vector<5x128xi32>
    %4 = vector.broadcast %1 : vector<1x128xi32> to vector<5x128xi32>
    %5 = arith.cmpi eq, %3, %4 : vector<5x128xi32>
    %6 = arith.extui %5 : vector<5x128xi1> to vector<5x128xi32>
    %7 = arith.sitofp %6 : vector<5x128xi32> to vector<5x128xf32>
    %cst = arith.constant dense<0xFF800000> : vector<128xf32>
    %8 = vector.multi_reduction <maximumf>, %0, %cst [0] : vector<5x128xf32> to vector<128xf32>
    %9 = vector.shape_cast %8 : vector<128xf32> to vector<1x128xf32>
    %10 = vector.broadcast %9 : vector<1x128xf32> to vector<5x128xf32>
    %11 = arith.subf %0, %10 : vector<5x128xf32>
    %12 = math.exp %11 : vector<5x128xf32>
    %cst_5 = arith.constant dense<0.000000e+00> : vector<128xf32>
    %13 = vector.multi_reduction <add>, %12, %cst_5 [0] : vector<5x128xf32> to vector<128xf32>
    %14 = vector.shape_cast %13 : vector<128xf32> to vector<1x128xf32>
    %15 = math.log %14 : vector<1x128xf32>
    %16 = arith.mulf %7, %11 : vector<5x128xf32>
    %cst_6 = arith.constant dense<0.000000e+00> : vector<128xf32>
    %17 = vector.multi_reduction <add>, %16, %cst_6 [0] : vector<5x128xf32> to vector<128xf32>
    %18 = vector.shape_cast %17 : vector<128xf32> to vector<1x128xf32>
    %19 = arith.subf %18, %15 : vector<1x128xf32>
    %cst_7 = arith.constant dense<0.000000e+00> : vector<128xf32>
    %20 = vector.multi_reduction <add>, %11, %cst_7 [0] : vector<5x128xf32> to vector<128xf32>
    %21 = vector.shape_cast %20 : vector<128xf32> to vector<1x128xf32>
    %cst_8 = arith.constant 5.000000e+00 : f32
    %22 = vector.broadcast %cst_8 : f32 to vector<1x128xf32>
    %23 = arith.mulf %22, %15 : vector<1x128xf32>
    %24 = arith.subf %21, %23 : vector<1x128xf32>
    %25 = vector.broadcast %2 : vector<5x1xf32> to vector<5x128xf32>
    %26 = arith.mulf %25, %7 : vector<5x128xf32>
    %cst_9 = arith.constant dense<0.000000e+00> : vector<128xf32>
    %27 = vector.multi_reduction <add>, %26, %cst_9 [0] : vector<5x128xf32> to vector<128xf32>
    %28 = vector.shape_cast %27 : vector<128xf32> to vector<1x128xf32>
    %29 = math.exp %19 : vector<1x128xf32>
    %cst_10 = arith.constant 1.000000e+00 : f32
    %30 = vector.broadcast %cst_10 : f32 to vector<1x128xf32>
    %31 = arith.subf %30, %29 : vector<1x128xf32>
    %32 = arith.mulf %31, %31 : vector<1x128xf32>
    %33 = arith.mulf %28, %32 : vector<1x128xf32>
    %cst_11 = arith.constant 0.000000e+00 : f32
    %34 = vector.broadcast %cst_11 : f32 to vector<1x128xf32>
    %35 = arith.subf %34, %19 : vector<1x128xf32>
    %cst_12 = arith.constant 4.375000e-01 : f32
    %36 = vector.broadcast %cst_12 : f32 to vector<1x128xf32>
    %37 = arith.addf %33, %36 : vector<1x128xf32>
    %38 = arith.mulf %35, %37 : vector<1x128xf32>
    %cst_13 = arith.constant 1.250000e-02 : f32
    %39 = vector.broadcast %cst_13 : f32 to vector<1x128xf32>
    %40 = arith.mulf %39, %24 : vector<1x128xf32>
    %41 = arith.subf %38, %40 : vector<1x128xf32>
    %c0_i32 = arith.constant 0 : i32
    %42 = arith.cmpi eq, %arg1, %c0_i32 : i32
    %43 = arith.extui %42 : i1 to i32
    %c0_i32_14 = arith.constant 0 : i32
    %44 = arith.cmpi ne, %43, %c0_i32_14 : i32
    scf.if %44 {
      %cst_20 = arith.constant 0.000000e+00 : f32
      %58 = vector.broadcast %cst_20 : f32 to vector<1x128xf32>
      %c0_21 = arith.constant 0 : index
      %c0_22 = arith.constant 0 : index
      %59 = vector.load %arg6[%c0_21, %c0_22] : memref<1x128xf32, #tpu.memory_space<vmem>>, vector<1x128xf32>
      tpu.vector_store %arg6[%c0_21, %c0_22], %58 {strides = array<i32>} : memref<1x128xf32, #tpu.memory_space<vmem>>, vector<1x128xf32>,
    } else {
    }
    %c1_i32 = arith.constant 1 : i32
    %45 = arith.muli %arg0, %c1_i32 : i32
    %46 = arith.addi %45, %arg1 : i32
    %c128_i32 = arith.constant 128 : i32
    %47 = arith.muli %46, %c128_i32 : i32
    %c128_i32_15 = arith.constant 128 : i32
    %48 = arith.addi %47, %c128_i32_15 : i32
    %c8_i32 = arith.constant 8 : i32
    %49 = arith.cmpi sgt, %48, %c8_i32 : i32
    %true = arith.constant true
    %50 = arith.xori %49, %true : i1
    %51 = arith.extui %50 : i1 to i32
    %c0_i32_16 = arith.constant 0 : i32
    %52 = arith.cmpi ne, %51, %c0_i32_16 : i32
    scf.if %52 {
      %c0_20 = arith.constant 0 : index
      %c0_21 = arith.constant 0 : index
      %58 = vector.load %arg6[%c0_20, %c0_21] : memref<1x128xf32, #tpu.memory_space<vmem>>, vector<1x128xf32>
      %59 = arith.addf %58, %41 : vector<1x128xf32>
      %c0_22 = arith.constant 0 : index
      %c0_23 = arith.constant 0 : index
      %60 = vector.load %arg6[%c0_22, %c0_23] : memref<1x128xf32, #tpu.memory_space<vmem>>, vector<1x128xf32>
      tpu.vector_store %arg6[%c0_22, %c0_23], %59 {strides = array<i32>} : memref<1x128xf32, #tpu.memory_space<vmem>>, vector<1x128xf32>,
    } else {
    }
    %53 = arith.extui %49 : i1 to i32
    %c0_i32_17 = arith.constant 0 : i32
    %54 = arith.cmpi ne, %53, %c0_i32_17 : i32
    scf.if %54 {
      %58 = tpu.iota {dimensions = array<i32: 1>} : vector<1x128xi32>
      %59 = vector.broadcast %47 : i32 to vector<1x128xi32>
      %60 = arith.addi %59, %58 : vector<1x128xi32>
      %c0_20 = arith.constant 0 : index
      %c0_21 = arith.constant 0 : index
      %61 = vector.load %arg6[%c0_20, %c0_21] : memref<1x128xf32, #tpu.memory_space<vmem>>, vector<1x128xf32>
      %c8_i32_22 = arith.constant 8 : i32
      %62 = vector.broadcast %c8_i32_22 : i32 to vector<1x128xi32>
      %63 = arith.cmpi slt, %60, %62 : vector<1x128xi32>
      %cst_23 = arith.constant 0.000000e+00 : f32
      %64 = vector.broadcast %cst_23 : f32 to vector<1x128xf32>
      %65 = arith.select %63, %41, %64 : vector<1x128xi1>, vector<1x128xf32>
      %66 = arith.addf %61, %65 : vector<1x128xf32>
      %c0_24 = arith.constant 0 : index
      %c0_25 = arith.constant 0 : index
      %67 = vector.load %arg6[%c0_24, %c0_25] : memref<1x128xf32, #tpu.memory_space<vmem>>, vector<1x128xf32>
      tpu.vector_store %arg6[%c0_24, %c0_25], %66 {strides = array<i32>} : memref<1x128xf32, #tpu.memory_space<vmem>>, vector<1x128xf32>,
    } else {
    }
    %c0_i32_18 = arith.constant 0 : i32
    %55 = arith.cmpi eq, %arg1, %c0_i32_18 : i32
    %56 = arith.extui %55 : i1 to i32
    %c0_i32_19 = arith.constant 0 : i32
    %57 = arith.cmpi ne, %56, %c0_i32_19 : i32
    scf.if %57 {
      %c0_20 = arith.constant 0 : index
      %c0_21 = arith.constant 0 : index
      %58 = vector.load %arg6[%c0_20, %c0_21] : memref<1x128xf32, #tpu.memory_space<vmem>>, vector<1x128xf32>
      %59 = vector.shape_cast %58 : vector<1x128xf32> to vector<1x1x128xf32>
      %cst_22 = arith.constant dense<0.000000e+00> : vector<1xf32>
      %60 = vector.multi_reduction <add>, %59, %cst_22 [1, 2] : vector<1x1x128xf32> to vector<1xf32>
      %61 = vector.shape_cast %60 : vector<1xf32> to vector<1x1x1xf32>
      %62 = vector.extract %61[0, 0, 0] : f32 from vector<1x1x1xf32>
      %cst_23 = arith.constant 1.250000e-01 : f32
      %63 = arith.mulf %62, %cst_23 : f32
      %64 = tpu.iota {dimensions = array<i32: 0>} : vector<8x128xi32>
      %65 = tpu.iota {dimensions = array<i32: 1>} : vector<8x128xi32>
      %c0_i32_24 = arith.constant 0 : i32
      %66 = vector.broadcast %c0_i32_24 : i32 to vector<8x128xi32>
      %67 = arith.cmpi eq, %64, %66 : vector<8x128xi32>
      %c0_i32_25 = arith.constant 0 : i32
      %68 = vector.broadcast %c0_i32_25 : i32 to vector<8x128xi32>
      %69 = arith.cmpi eq, %65, %68 : vector<8x128xi32>
      %70 = arith.andi %67, %69 : vector<8x128xi1>
      %cst_26 = arith.constant 0.000000e+00 : f32
      %71 = vector.broadcast %63 : f32 to vector<8x128xf32>
      %72 = vector.broadcast %cst_26 : f32 to vector<8x128xf32>
      %73 = arith.select %70, %71, %72 : vector<8x128xi1>, vector<8x128xf32>
      %c0_27 = arith.constant 0 : index
      %c0_28 = arith.constant 0 : index
      %74 = vector.load %arg5[%c0_27, %c0_28] : memref<8x128xf32, #tpu.memory_space<vmem>>, vector<8x128xf32>
      tpu.vector_store %arg5[%c0_27, %c0_28], %73 {strides = array<i32>} : memref<8x128xf32, #tpu.memory_space<vmem>>, vector<8x128xf32>,
    } else {
    }
    return
  }
  func.func @transform_0(%arg0: i32, %arg1: i32) -> (i32, i32) {
    %c0_i32 = arith.constant 0 : i32
    %c0_i32_0 = arith.constant 0 : i32
    %c0_i32_1 = arith.constant 0 : i32
    return %c0_i32, %c0_i32_0 : i32, i32
  }
  func.func @transform_1(%arg0: i32, %arg1: i32) -> (i32, i32) {
    %c1_i32 = arith.constant 1 : i32
    %0 = arith.muli %arg0, %c1_i32 : i32
    %1 = arith.addi %0, %arg1 : i32
    %c0_i32 = arith.constant 0 : i32
    %c0_i32_0 = arith.constant 0 : i32
    return %c0_i32, %1 : i32, i32
  }
  func.func @transform_2(%arg0: i32, %arg1: i32) -> (i32, i32) {
    %c1_i32 = arith.constant 1 : i32
    %0 = arith.muli %arg0, %c1_i32 : i32
    %1 = arith.addi %0, %arg1 : i32
    %c0_i32 = arith.constant 0 : i32
    %c0_i32_0 = arith.constant 0 : i32
    return %c0_i32, %1 : i32, i32
  }
  func.func @transform_3(%arg0: i32, %arg1: i32) -> (i32, i32) {
    %c0_i32 = arith.constant 0 : i32
    %c0_i32_0 = arith.constant 0 : i32
    return %arg0, %c0_i32 : i32, i32
  }
}

</mosaic_0001>

<llo_original>
// kernel: tpu_custom_call.1
$region0: #{tpu_custom_call.1}
  #allocation0 [shape = 'u32[]', space=smem, size = 0x4, offset = 0x4, fixed_abs, tag = 'smem constant byte address 0x4 - core index']
  #allocation1 [shape = 'u32[72,128]{1,0:T(1,128)}', space=vmem, size = 0x9000, scoped, tag = 'internal scratch']
  #allocation2 [shape = 'f32[1,128]{1,0:T(1,128)}', space=vmem, size = 0x200, scoped, tag = 'scratch operand']
  %s0 = inlined_call_operand.vmem [shape: f32[5,1], index: 0, kind: input, shape index: {}]
  %s1 = inlined_call_operand.vmem [shape: f32[5,128], index: 1, kind: input, shape index: {}]
  %s2 = inlined_call_operand.vmem [shape: s32[1,128], index: 2, kind: input, shape index: {}]
  %s3 = inlined_call_operand.hbm [shape: f32[8,128], index: 3, kind: output, shape index: {}]
  %s4 = sld [smem:[#allocation0]]
  $region38: #{tpu_custom_call.1} parent=0
    _
  %s6 = ssub.s32 1, %s4
  %s7 = scalar_select 0, %s6, %s4
  $region1: #{tpu_custom_call.1} parent=0
    #allocation3 [shape = 'u8[4096]{0}', space=vmem, size = 0x1000, scoped, tag = 'output window, operand 0, single buffered']
    #allocation4 [shape = 's32[1]{0}', space=sflag, size = 0x4, scoped, tag = 'scoped memory for tpu_custom_call.1']
    %8 = vsyncpa [#allocation4], 0
    // Predicated region
    $region2: #{tpu_custom_call.1} parent=1 // pred_check
      _
    $region3: #{tpu_custom_call.1} parent=1 // pred_check_branch
      %10 = sbr.rel (0) target = $region5
    $region4: #{tpu_custom_call.1} parent=1 // pred_region
      _
    $region5: #{tpu_custom_call.1} parent=1 // pred_fallthru
      _
    // Predicated region
    $region6: #{tpu_custom_call.1} parent=1 // pred_check
      _
    $region7: #{tpu_custom_call.1} parent=1 // pred_check_branch
      %12 = sbr.rel (0) target = $region9
    $region8: #{tpu_custom_call.1} parent=1 // pred_region
      %s13 = sadd.s32 0, 0
      %p14 = scmp.lt.s32.totalorder %s13, 0
      %s15 = scalar_select %p14, %s13, 0
      %s16 = smul.addr %s15, 8
      %s17 = scalar_lea.vmem %s1, %s16
      %s18 = sadd.s32 0, 0
    $region9: #{tpu_custom_call.1} parent=1 // pred_fallthru
      _
    // Predicated region
    $region10: #{tpu_custom_call.1} parent=1 // pred_check
      _
    $region11: #{tpu_custom_call.1} parent=1 // pred_check_branch
      %20 = sbr.rel (0) target = $region13
    $region12: #{tpu_custom_call.1} parent=1 // pred_region
      %s21 = sadd.s32 0, 0
      %p22 = scmp.lt.s32.totalorder %s21, 0
      %s23 = scalar_select %p22, %s21, 0
      %s24 = scalar_lea.vmem %s2, %s23
      %s25 = sadd.s32 0, 0
    $region13: #{tpu_custom_call.1} parent=1 // pred_fallthru
      _
    %s26 = sadd.s32 0, 0
    %p27 = scmp.lt.s32.totalorder %s26, 0
    %s28 = scalar_select %p27, %s26, 0
    %s29 = smul.addr %s28, 8
    %s30 = scalar_lea.vmem %s1, %s29
    %s31 = sadd.s32 0, 0
    %p32 = scmp.lt.s32.totalorder %s31, 0
    %s33 = scalar_select %p32, %s31, 0
    %s34 = scalar_lea.vmem %s2, %s33
    %s35 = sadd.s32 0, 0
    %p36 = scmp.lt.s32.totalorder %s35, 0
    %s37 = scalar_select %p36, %s35, 0
    %s38 = smul.addr %s37, 8
    %s39 = scalar_lea.vmem %s1, %s38
    %s40 = sadd.s32 0, 0
    %s41 = sadd.s32 0, 0
    %p42 = scmp.lt.s32.totalorder %s41, 0
    %s43 = scalar_select %p42, %s41, 0
    %s44 = scalar_lea.vmem %s2, %s43
    %s45 = sadd.s32 0, 0
    %v46 = vld [vmem:[%s39] sm:$0x1f]
    %v47 = vld [vmem:[%s44] sm:$0x1]
    %v48 = vld [vmem:[%s0] sm:$0x1f]
    %v49 = vlaneseq
    %v50 = vshrl.u32 %v49, 7
    %v51 = vperm.slane %v47, 0
    %vm52 = vcmp.eq.s32.totalorder %v50, %v51
    %v53 = vsel %vm52, 1, 0
    %v54 = vcvt.s32.f32 %v53
    %vm55 = vcmask 1044480
    %v56 = vsel %vm55, %v46, -inf
    %v57 = vrot.slane %v56, 4
    %v58 = vmax.f32 %v56, %v57
    %v59 = vrot.slane %v58, 2
    %v60 = vmax.f32 %v58, %v59
    %v61 = vrot.slane %v60, 1
    %v62 = vmax.f32 %v60, %v61
    %v63 = vsub.f32 %v46, %v62
    %v64 = vmul.f32 %v63, 1.442695
    %v65 = vpow.pop %v64
    %v66 = vsel %vm55, %v65, 0.0
    %v67 = vrot.slane %v66, 4
    %v68 = vadd.f32 %v66, %v67
    %v69 = vrot.slane %v68, 2
    %v70 = vadd.f32 %v68, %v69
    %v71 = vrot.slane %v70, 1
    %v72 = vadd.f32 %v70, %v71
    %v73 = vlog2.pop %v72
    %v74 = vmul.f32 %v73, 0.6931472
    %v75 = vmul.f32 %v54, %v63
    %v76 = vsel %vm55, %v75, 0.0
    %v77 = vrot.slane %v76, 4
    %v78 = vadd.f32 %v76, %v77
    %v79 = vrot.slane %v78, 2
    %v80 = vadd.f32 %v78, %v79
    %v81 = vrot.slane %v80, 1
    %v82 = vadd.f32 %v80, %v81
    %v83 = vsub.f32 %v82, %v74
    %v84 = vsel %vm55, %v63, 0.0
    %v85 = vrot.slane %v84, 4
    %v86 = vadd.f32 %v84, %v85
    %v87 = vrot.slane %v86, 2
    %v88 = vadd.f32 %v86, %v87
    %v89 = vrot.slane %v88, 1
    %v90 = vadd.f32 %v88, %v89
    %v91 = vmul.f32 %v74, 5.0
    %v92 = vsub.f32 %v90, %v91
    %94 = vset.pattern.permute.xlu0 0
    %95 = vperm.xlu0 %94, %v48
    %v96 = vpop.permute.xlu0 %95
    %v98 = vmul.f32 %v96, %v54
    %v99 = vsel %vm55, %v98, 0.0
    %v100 = vrot.slane %v99, 4
    %v101 = vadd.f32 %v99, %v100
    %v102 = vrot.slane %v101, 2
    %v103 = vadd.f32 %v101, %v102
    %v104 = vrot.slane %v103, 1
    %v105 = vadd.f32 %v103, %v104
    %v106 = vmul.f32 %v83, 1.442695
    %v107 = vpow.pop %v106
    %v108 = vsub.f32 1.0, %v107
    %v109 = vmul.f32 %v108, %v108
    %v110 = vmul.f32 %v105, %v109
    %v111 = vsub.f32 0.0, %v83
    %v112 = vadd.f32 %v110, 0.4375
    %v113 = vmul.f32 %v111, %v112
    %v114 = vmul.f32 %v92, 0.0125
    %v115 = vsub.f32 %v113, %v114
    %p116 = scmp.eq.s32.totalorder 0, 0
    // Predicated region
    $region14: #{tpu_custom_call.1} parent=1 // pred_check
      %p117 = pneg %p116
    $region15: #{tpu_custom_call.1} parent=1 // pred_check_branch
      %119 = sbr.rel (%p117) target = $region17
    $region16: #{tpu_custom_call.1} parent=1 // pred_region
      %120 = vst [vmem:[#allocation2] sm:$0x1] 0.0
    $region17: #{tpu_custom_call.1} parent=1 // pred_fallthru
      _
    %s121 = sadd.s32 0, 0
    %s122 = smul.u32 %s121, 128
    %s123 = sadd.s32 %s122, 128
    %p124 = scmp.gt.s32.totalorder %s123, 8
    %p125 = scmp.le.s32.totalorder %s123, 8
    // Predicated region
    $region18: #{tpu_custom_call.1} parent=1 // pred_check
      %p126 = pneg %p125
    $region19: #{tpu_custom_call.1} parent=1 // pred_check_branch
      %128 = sbr.rel (%p126) target = $region21
    $region20: #{tpu_custom_call.1} parent=1 // pred_region
      %v129 = vld [vmem:[#allocation2] sm:$0x1]
      %v130 = vadd.f32 %v129, %v115
      %131 = vst [vmem:[#allocation2] sm:$0x1] %v130
    $region21: #{tpu_custom_call.1} parent=1 // pred_fallthru
      _
    // Predicated region
    $region22: #{tpu_custom_call.1} parent=1 // pred_check
      %p132 = pneg %p124
    $region23: #{tpu_custom_call.1} parent=1 // pred_check_branch
      %134 = sbr.rel (%p132) target = $region25
    $region24: #{tpu_custom_call.1} parent=1 // pred_region
      %v135 = vlaneseq
      %v136 = vand.u32 %v135, 127
      %v137 = vstv %s122
      %v138 = vadd.s32 %v137, %v136
      %v139 = vld [vmem:[#allocation2] sm:$0x1]
      %vm140 = vcmp.lt.s32.totalorder %v138, 8
      %v141 = vsel %vm140, %v115, 0.0
      %v142 = vadd.f32 %v139, %v141
      %143 = vst [vmem:[#allocation2] sm:$0x1] %v142
    $region25: #{tpu_custom_call.1} parent=1 // pred_fallthru
      _
    // Predicated region
    $region26: #{tpu_custom_call.1} parent=1 // pred_check
      %p144 = pneg %p116
    $region27: #{tpu_custom_call.1} parent=1 // pred_check_branch
      %146 = sbr.rel (%p144) target = $region29
    $region28: #{tpu_custom_call.1} parent=1 // pred_region
      %v147 = vld [vmem:[#allocation2] sm:$0x1]
      %vm148 = vcmask 1040384
      %v149 = vsel %vm148, %v147, 0.0
      %150 = vadd.xlane.f32.xlu0 %v149
      %v151 = vpop.xlane.xlu0 %150
      %v152 = vrot.slane %v151, 4
      %v153 = vadd.f32 %v151, %v152
      %v154 = vrot.slane %v153, 2
      %v155 = vadd.f32 %v153, %v154
      %v156 = vrot.slane %v155, 1
      %v157 = vadd.f32 %v155, %v156
      %s158 = vtos %v157
      %s159 = smul.f32 %s158, 0.125
      %v160 = vlaneseq
      %v161 = vand.u32 %v160, 127
      %vm162 = vcmp.eq.s32.totalorder %v50, 0
      %vm163 = vcmp.eq.s32.totalorder %v161, 0
      %vm164 = vmand %vm162, %vm163
      %v165 = vstv %s159
      %v166 = vsel %vm164, %v165, 0.0
      %167 = vst [vmem:[#allocation3] sm:$0xff] %v166
    $region29: #{tpu_custom_call.1} parent=1 // pred_fallthru
      _
    // Predicated region
    $region30: #{tpu_custom_call.1} parent=1 // pred_check
      _
    $region31: #{tpu_custom_call.1} parent=1 // pred_check_branch
      %169 = sbr.rel (0) target = $region33
    $region32: #{tpu_custom_call.1} parent=1 // pred_region
      %171 = vsyncadd [#allocation4], 0
      %s173 = sshll.u32 [#allocation3], 4
      %s174 = int_to_ptr.vmem [resolvable:$true] %s173
      %s175 = sshll.u32 %s3, 4
      %s176 = int_to_ptr.hbm [resolvable:$true] %s175
      %178 = dma.vmem_to_hbm [thread:$0]  %s174, 128, %s176, [#allocation4]
    $region33: #{tpu_custom_call.1} parent=1 // pred_fallthru
      _
    // Predicated region
    $region34: #{tpu_custom_call.1} parent=1 // pred_check
      _
    $region35: #{tpu_custom_call.1} parent=1 // pred_check_branch
      %180 = sbr.rel (0) target = $region37
    $region36: #{tpu_custom_call.1} parent=1 // pred_region
      %182 = dma.done [#allocation4], 128
    $region37: #{tpu_custom_call.1} parent=1 // pred_fallthru
      _
    %183 = vsyncpa [#allocation4], 1

</llo_original>
